<compile_context>
chip_gen: v6e
topology: v6e:2x2x1
jax: 0.10.0
libtpu: 0.0.40
codegen_flags: <defaults>
</compile_context>

<pallas_src>
import functools

import jax
import jax.numpy as jnp
from jax import lax
from jax.experimental import pallas as pl
from jax.experimental.pallas import tpu as pltpu


def _cdiv(a, b):
    return -(-a // b)


def _vmem_capacity_bytes():
    try:
        return int(pltpu.get_tpu_info().vmem_capacity_bytes)
    except Exception:
        return 64 << 20  # conservative fallback (v7x per-TensorCore VMEM)


def _estimate_vmem(tm, tk, d_model, csize, xsize, osize, n_chunks):
    """VMEM bytes needed by the pipeline for the chosen tiling."""
    n_wbuf = 1 if n_chunks == 1 else 2            # Buffered(1) when resident
    xbuf = 2 * tm * d_model * xsize               # x row tiles (double buffer)
    obuf = 2 * tm * d_model * osize               # out row tiles
    wbuf = n_wbuf * (d_model * tk * csize         # W1 chunk(s)
                     + tk * d_model * csize       # W2 chunk(s)
                     + tk * 4)                    # b1 chunk(s), f32
    consts = 3 * d_model * 4                      # b2, gamma, beta
    acc = tm * d_model * 4 if n_chunks > 1 else 0  # f32 accumulator scratch
    inter = tm * tk * 4 + tm * d_model * 4        # h + epilogue temporaries
    return xbuf + obuf + wbuf + consts + acc + inter


_TM_CANDIDATES = (512, 256, 128, 64, 32, 16)      # multiples of 16 (bf16 rows)
_TK_CANDIDATES = (2048, 1024, 512, 256, 128)      # 128-lane aligned d_ff chunks


def _select_tiling(n, d_model, d_ff, csize, xsize, osize, budget, tm, tk_ff):
    """Pick (tm, tk_ff, n_ff_chunks).  Prefer fully-resident weights with the
    largest row tile; otherwise chunk d_ff, maximizing tm first."""
    tm_cands = (tm,) if tm is not None else _TM_CANDIDATES

    if tk_ff is not None:                         # user-forced chunk size
        n_chunks = _cdiv(d_ff, tk_ff)
        for t in tm_cands:
            te = min(t, n)
            if _estimate_vmem(te, tk_ff, d_model, csize, xsize, osize,
                              n_chunks) <= budget:
                return te, tk_ff, n_chunks
        return min(tm_cands[-1], n), tk_ff, n_chunks

    # 1) fully-resident weights (single DMA, reused across all row tiles).
    for t in tm_cands:
        te = min(t, n)
        if _estimate_vmem(te, d_ff, d_model, csize, xsize, osize, 1) <= budget:
            return te, d_ff, 1

    # 2) chunked d_ff: largest tm first (weight HBM traffic ~ 1/tm), then tk.
    for t in tm_cands:
        te = min(t, n)
        for tk in _TK_CANDIDATES:
            if tk >= d_ff:
                continue
            n_chunks = _cdiv(d_ff, tk)
            if _estimate_vmem(te, tk, d_model, csize, xsize, osize,
                              n_chunks) <= budget:
                return te, tk, n_chunks

    # 3) last resort: smallest sane tiling.
    return min(16, n), 128, _cdiv(d_ff, 128)


def _ln_epilogue(x_f32, y_f32, g, b, out_dtype):
    """residual + LayerNorm (eps=1e-5, biased variance), two-pass in f32."""
    r = x_f32 + y_f32
    inv_d = jnp.float32(1.0 / r.shape[-1])
    mean = jnp.sum(r, axis=-1, keepdims=True) * inv_d
    rc = r - mean
    var = jnp.sum(rc * rc, axis=-1, keepdims=True) * inv_d
    return (rc * lax.rsqrt(var + jnp.float32(1e-5)) * g + b).astype(out_dtype)


def ffn_kernel_resident(x_ref, w1_ref, b1_ref, w2_ref, b2_ref, g_ref, bt_ref,
                        o_ref):
    """Weights fully VMEM-resident: 1-D grid over row tiles, no scratch."""
    xv = x_ref[...]
    h = jnp.dot(xv.astype(w1_ref.dtype), w1_ref[...],
                preferred_element_type=jnp.float32) + b1_ref[...]
    h = jnp.maximum(h, 0.0)
    y = jnp.dot(h.astype(w2_ref.dtype), w2_ref[...],
                preferred_element_type=jnp.float32) + b2_ref[...]
    y = jnp.maximum(y, 0.0)
    o_ref[...] = _ln_epilogue(xv.astype(jnp.float32), y, g_ref[...],
                              bt_ref[...], o_ref.dtype)


def ffn_kernel_chunked(x_ref, w1_ref, b1_ref, w2_ref, b2_ref, g_ref, bt_ref,
                       o_ref, acc_ref):
    """d_ff chunked on the inner ('arbitrary') axis with an f32 accumulator;
    second ReLU + residual + LayerNorm run once on the last chunk."""
    k = pl.program_id(1)

    @pl.when(k == 0)
    def _():
        acc_ref[...] = jnp.zeros_like(acc_ref)

    h = jnp.dot(x_ref[...].astype(w1_ref.dtype), w1_ref[...],
                preferred_element_type=jnp.float32) + b1_ref[...]
    h = jnp.maximum(h, 0.0)
    acc_ref[...] += jnp.dot(h.astype(w2_ref.dtype), w2_ref[...],
                            preferred_element_type=jnp.float32)

    @pl.when(k == pl.num_programs(1) - 1)
    def _():
        y = jnp.maximum(acc_ref[...] + b2_ref[...], 0.0)
        o_ref[...] = _ln_epilogue(x_ref[...].astype(jnp.float32), y,
                                  g_ref[...], bt_ref[...], o_ref.dtype)


@functools.partial(jax.jit, static_argnames=("tm", "tk_ff", "compute_dtype"))
def feed_forward_layer(x, w1, b1, w2, b2, gamma, beta, *,
                       tm=None, tk_ff=None, compute_dtype=jnp.bfloat16):
    """x: [..., d_model] -> [..., d_model].  Weights stored as [in, out]."""
    orig_shape = x.shape
    out_dtype = x.dtype
    d_model = x.shape[-1]
    d_ff = w1.shape[-1]
    compute_dtype = jnp.dtype(compute_dtype)

    # x stays in its storage dtype; residual/LayerNorm see full precision.
    x2d = x.reshape(-1, d_model)
    n = x2d.shape[0]

    csize = compute_dtype.itemsize
    xsize = jnp.dtype(x.dtype).itemsize
    osize = jnp.dtype(out_dtype).itemsize

    capacity = _vmem_capacity_bytes()
    budget = int(capacity * 0.75)          # leave headroom for compiler scratch
    tm_eff, tk_eff, n_chunks = _select_tiling(
        n, d_model, d_ff, csize, xsize, osize, budget, tm, tk_ff)
    vmem_limit = int(capacity * 0.85)

    w1c = w1.astype(compute_dtype)
    w2c = w2.astype(compute_dtype)
    b1_2d = b1.reshape(1, d_ff).astype(jnp.float32)
    b2_2d = b2.reshape(1, d_model).astype(jnp.float32)
    g_2d = gamma.reshape(1, d_model).astype(jnp.float32)
    bt_2d = beta.reshape(1, d_model).astype(jnp.float32)

    const1 = pl.Buffered(1)                # constant-index blocks: 1 buffer
    grid_rows = _cdiv(n, tm_eff)           # partial last block masked by Pallas

    if n_chunks == 1:
        out = pl.pallas_call(
            ffn_kernel_resident,
            out_shape=jax.ShapeDtypeStruct((n, d_model), out_dtype),
            grid_spec=pltpu.PrefetchScalarGridSpec(
                num_scalar_prefetch=0,
                grid=(grid_rows,),
                in_specs=[
                    pl.BlockSpec((tm_eff, d_model), lambda i: (i, 0)),   # x
                    pl.BlockSpec((d_model, d_ff), lambda i: (0, 0),
                                 pipeline_mode=const1),                  # W1
                    pl.BlockSpec((1, d_ff), lambda i: (0, 0),
                                 pipeline_mode=const1),                  # b1
                    pl.BlockSpec((d_ff, d_model), lambda i: (0, 0),
                                 pipeline_mode=const1),                  # W2
                    pl.BlockSpec((1, d_model), lambda i: (0, 0),
                                 pipeline_mode=const1),                  # b2
                    pl.BlockSpec((1, d_model), lambda i: (0, 0),
                                 pipeline_mode=const1),                  # gamma
                    pl.BlockSpec((1, d_model), lambda i: (0, 0),
                                 pipeline_mode=const1),                  # beta
                ],
                out_specs=pl.BlockSpec((tm_eff, d_model), lambda i: (i, 0)),
                scratch_shapes=[],
            ),
            compiler_params=pltpu.CompilerParams(
                dimension_semantics=("parallel",),
                vmem_limit_bytes=vmem_limit,
            ),
        )(x2d, w1c, b1_2d, w2c, b2_2d, g_2d, bt_2d)
    else:
        # Zero-pad d_ff to a chunk multiple (relu(0+0) @ 0 contributes 0), so
        # awkward d_ff never forces fully-resident weights.
        d_ff_pad = n_chunks * tk_eff
        if d_ff_pad != d_ff:
            w1c = jnp.pad(w1c, ((0, 0), (0, d_ff_pad - d_ff)))
            b1_2d = jnp.pad(b1_2d, ((0, 0), (0, d_ff_pad - d_ff)))
            w2c = jnp.pad(w2c, ((0, d_ff_pad - d_ff), (0, 0)))

        out = pl.pallas_call(
            ffn_kernel_chunked,
            out_shape=jax.ShapeDtypeStruct((n, d_model), out_dtype),
            grid_spec=pltpu.PrefetchScalarGridSpec(
                num_scalar_prefetch=0,
                grid=(grid_rows, n_chunks),
                in_specs=[
                    pl.BlockSpec((tm_eff, d_model), lambda i, k: (i, 0)),  # x
                    # TODO(synk): bump to pl.Buffered(3) if profiling shows
                    # exposed weight DMA with many small d_ff chunks.
                    pl.BlockSpec((d_model, tk_eff), lambda i, k: (0, k)),  # W1
                    pl.BlockSpec((1, tk_eff), lambda i, k: (0, k)),        # b1
                    pl.BlockSpec((tk_eff, d_model), lambda i, k: (k, 0)),  # W2
                    pl.BlockSpec((1, d_model), lambda i, k: (0, 0),
                                 pipeline_mode=const1),                    # b2
                    pl.BlockSpec((1, d_model), lambda i, k: (0, 0),
                                 pipeline_mode=const1),                    # gamma
                    pl.BlockSpec((1, d_model), lambda i, k: (0, 0),
                                 pipeline_mode=const1),                    # beta
                ],
                out_specs=pl.BlockSpec((tm_eff, d_model), lambda i, k: (i, 0)),
                scratch_shapes=[pltpu.VMEM((tm_eff, d_model), jnp.float32)],
            ),
            compiler_params=pltpu.CompilerParams(
                dimension_semantics=("parallel", "arbitrary"),
                vmem_limit_bytes=vmem_limit,
            ),
        )(x2d, w1c, b1_2d, w2c, b2_2d, g_2d, bt_2d)

    return out.reshape(orig_shape)


def init_params(key, d_model, d_ff):
    """Deterministic init mimicking nn.Linear default (uniform +/- 1/sqrt(fan_in))."""
    k1, k2, k3, k4 = jax.random.split(key, 4)
    bound1 = 1.0 / (d_model ** 0.5)
    bound2 = 1.0 / (d_ff ** 0.5)
    w1 = jax.random.uniform(k1, (d_model, d_ff), jnp.float32, -bound1, bound1)
    b1 = jax.random.uniform(k2, (d_ff,), jnp.float32, -bound1, bound1)
    w2 = jax.random.uniform(k3, (d_ff, d_model), jnp.float32, -bound2, bound2)
    b2 = jax.random.uniform(k4, (d_model,), jnp.float32, -bound2, bound2)
    gamma = jnp.ones((d_model,), jnp.float32)
    beta = jnp.zeros((d_model,), jnp.float32)
    return w1, b1, w2, b2, gamma, beta


def reference(x, w1, b1, w2, b2, gamma, beta, compute_dtype=None):
    """Pure-JAX reference; optionally mimics the kernel's matmul dtype path
    (bf16 dot inputs, f32 accumulation, full-precision residual)."""
    if compute_dtype is not None:
        cd = jnp.dtype(compute_dtype)
        xd, w1c, w2c = x.astype(cd), w1.astype(cd), w2.astype(cd)
    else:
        xd, w1c, w2c = x, w1, w2
    h = jnp.maximum(
        jnp.dot(xd, w1c, preferred_element_type=jnp.float32) + b1, 0.0)
    if compute_dtype is not None:
        h = h.astype(compute_dtype)
    y = jnp.maximum(
        jnp.dot(h, w2c, preferred_element_type=jnp.float32) + b2, 0.0)
    r = x.astype(jnp.float32) + y          # residual uses full-precision x
    mean = jnp.mean(r, axis=-1, keepdims=True)
    var = jnp.mean((r - mean) ** 2, axis=-1, keepdims=True)
    out = (r - mean) / jnp.sqrt(var + 1e-5) * gamma + beta
    return out.astype(x.dtype)


if __name__ == "__main__":
    key = jax.random.PRNGKey(0)
    kx, kp, kx2, kp2 = jax.random.split(key, 4)

    # Case 1: resident-weight path. Strict f32 check + default-bf16 check.
    batch, seq, d_model, d_ff = 2, 8, 32, 64
    x = jax.random.normal(kx, (batch, seq, d_model), jnp.float32)
    params = init_params(kp, d_model, d_ff)

    out_f32 = jax.block_until_ready(
        feed_forward_layer(x, *params, compute_dtype=jnp.float32))
    ref_f32 = reference(x, *params)
    assert out_f32.shape == x.shape
    err_f32 = float(jnp.max(jnp.abs(out_f32 - ref_f32)))
    assert err_f32 < 1e-4, f"f32 mismatch vs reference: {err_f32}"

    out_bf16 = jax.block_until_ready(feed_forward_layer(x, *params))
    ref_bf16 = reference(x, *params, compute_dtype=jnp.bfloat16)
    err_bf16 = float(jnp.max(jnp.abs(out_bf16 - ref_bf16)))
    assert err_bf16 < 5e-3, f"bf16 mismatch vs reference: {err_bf16}"

    # Case 2: force the chunked path (tk_ff=256, d_ff=384 -> 2 chunks with
    # zero-padded weights) and a partial last row block (21 rows, tm=16).
    batch2, seq2, d_model2, d_ff2 = 3, 7, 32, 384
    x2 = jax.random.normal(kx2, (batch2, seq2, d_model2), jnp.float32)
    params2 = init_params(kp2, d_model2, d_ff2)
    out2 = jax.block_until_ready(
        feed_forward_layer(x2, *params2, tm=16, tk_ff=256,
                           compute_dtype=jnp.float32))
    ref2 = reference(x2, *params2)
    assert out2.shape == x2.shape
    err2 = float(jnp.max(jnp.abs(out2 - ref2)))
    assert err2 < 1e-4, f"chunked f32 mismatch vs reference: {err2}"

    print("KERNEL_OK")
</pallas_src>

<mosaic_0001>
module attributes {stable_mosaic.version = 11 : i64} {
  func.func @ffn_kernel_resident(%arg0: i32, %arg1: memref<16x32xf32, #tpu.memory_space<vmem>>, %arg2: memref<32x64xf32, #tpu.memory_space<vmem>>, %arg3: memref<1x64xf32, #tpu.memory_space<vmem>>, %arg4: memref<64x32xf32, #tpu.memory_space<vmem>>, %arg5: memref<1x32xf32, #tpu.memory_space<vmem>>, %arg6: memref<1x32xf32, #tpu.memory_space<vmem>>, %arg7: memref<1x32xf32, #tpu.memory_space<vmem>>, %arg8: memref<16x32xf32, #tpu.memory_space<vmem>>) attributes {dimension_semantics = [#tpu.dimension_semantics<parallel>], iteration_bounds = array<i64: 1>, scalar_prefetch = 0 : i64, scratch_operands = 0 : i64, tpu.core_type = #tpu.core_type<tc>, window_params = [{transform_indices = @transform_0, window_bounds = array<i64: 16, 32>}, {pipeline_mode = #tpu.pipeline_mode<synchronous>, transform_indices = @transform_1, window_bounds = array<i64: 32, 64>}, {pipeline_mode = #tpu.pipeline_mode<synchronous>, transform_indices = @transform_2, window_bounds = array<i64: 1, 64>}, {pipeline_mode = #tpu.pipeline_mode<synchronous>, transform_indices = @transform_3, window_bounds = array<i64: 64, 32>}, {pipeline_mode = #tpu.pipeline_mode<synchronous>, transform_indices = @transform_4, window_bounds = array<i64: 1, 32>}, {pipeline_mode = #tpu.pipeline_mode<synchronous>, transform_indices = @transform_5, window_bounds = array<i64: 1, 32>}, {pipeline_mode = #tpu.pipeline_mode<synchronous>, transform_indices = @transform_6, window_bounds = array<i64: 1, 32>}, {transform_indices = @transform_7, window_bounds = array<i64: 16, 32>}]} {
    %c0 = arith.constant 0 : index
    %c0_0 = arith.constant 0 : index
    %0 = vector.load %arg1[%c0, %c0_0] : memref<16x32xf32, #tpu.memory_space<vmem>>, vector<16x32xf32>
    %c0_1 = arith.constant 0 : index
    %c0_2 = arith.constant 0 : index
    %1 = vector.load %arg2[%c0_1, %c0_2] : memref<32x64xf32, #tpu.memory_space<vmem>>, vector<32x64xf32>
    %cst = arith.constant dense<0.000000e+00> : vector<16x64xf32>
    %2 = tpu.matmul %0, %1, %cst {dimension_numbers = #tpu.dot_dimension_numbers<[1], [0], [0], [1], [0, 0, 1, 1], [], []>} : vector<16x32xf32>, vector<32x64xf32>, vector<16x64xf32> -> vector<16x64xf32>
    %c0_3 = arith.constant 0 : index
    %c0_4 = arith.constant 0 : index
    %3 = vector.load %arg3[%c0_3, %c0_4] : memref<1x64xf32, #tpu.memory_space<vmem>>, vector<1x64xf32>
    %4 = vector.broadcast %3 : vector<1x64xf32> to vector<16x64xf32>
    %5 = arith.addf %2, %4 : vector<16x64xf32>
    %cst_5 = arith.constant 0.000000e+00 : f32
    %6 = vector.broadcast %cst_5 : f32 to vector<16x64xf32>
    %7 = arith.maximumf %5, %6 : vector<16x64xf32>
    %c0_6 = arith.constant 0 : index
    %c0_7 = arith.constant 0 : index
    %8 = vector.load %arg4[%c0_6, %c0_7] : memref<64x32xf32, #tpu.memory_space<vmem>>, vector<64x32xf32>
    %cst_8 = arith.constant dense<0.000000e+00> : vector<16x32xf32>
    %9 = tpu.matmul %7, %8, %cst_8 {dimension_numbers = #tpu.dot_dimension_numbers<[1], [0], [0], [1], [0, 0, 1, 1], [], []>} : vector<16x64xf32>, vector<64x32xf32>, vector<16x32xf32> -> vector<16x32xf32>
    %c0_9 = arith.constant 0 : index
    %c0_10 = arith.constant 0 : index
    %10 = vector.load %arg5[%c0_9, %c0_10] : memref<1x32xf32, #tpu.memory_space<vmem>>, vector<1x32xf32>
    %11 = vector.broadcast %10 : vector<1x32xf32> to vector<16x32xf32>
    %12 = arith.addf %9, %11 : vector<16x32xf32>
    %cst_11 = arith.constant 0.000000e+00 : f32
    %13 = vector.broadcast %cst_11 : f32 to vector<16x32xf32>
    %14 = arith.maximumf %12, %13 : vector<16x32xf32>
    %c0_12 = arith.constant 0 : index
    %c0_13 = arith.constant 0 : index
    %15 = vector.load %arg6[%c0_12, %c0_13] : memref<1x32xf32, #tpu.memory_space<vmem>>, vector<1x32xf32>
    %c0_14 = arith.constant 0 : index
    %c0_15 = arith.constant 0 : index
    %16 = vector.load %arg7[%c0_14, %c0_15] : memref<1x32xf32, #tpu.memory_space<vmem>>, vector<1x32xf32>
    %17 = arith.addf %0, %14 : vector<16x32xf32>
    %cst_16 = arith.constant dense<0.000000e+00> : vector<16xf32>
    %18 = vector.multi_reduction <add>, %17, %cst_16 [1] : vector<16x32xf32> to vector<16xf32>
    %19 = vector.shape_cast %18 : vector<16xf32> to vector<16x1xf32>
    %cst_17 = arith.constant 3.125000e-02 : f32
    %20 = vector.broadcast %cst_17 : f32 to vector<16x1xf32>
    %21 = arith.mulf %19, %20 : vector<16x1xf32>
    %22 = vector.broadcast %21 : vector<16x1xf32> to vector<16x32xf32>
    %23 = arith.subf %17, %22 : vector<16x32xf32>
    %24 = arith.mulf %23, %23 : vector<16x32xf32>
    %cst_18 = arith.constant dense<0.000000e+00> : vector<16xf32>
    %25 = vector.multi_reduction <add>, %24, %cst_18 [1] : vector<16x32xf32> to vector<16xf32>
    %26 = vector.shape_cast %25 : vector<16xf32> to vector<16x1xf32>
    %cst_19 = arith.constant 3.125000e-02 : f32
    %27 = vector.broadcast %cst_19 : f32 to vector<16x1xf32>
    %28 = arith.mulf %26, %27 : vector<16x1xf32>
    %cst_20 = arith.constant 9.99999974E-6 : f32
    %29 = vector.broadcast %cst_20 : f32 to vector<16x1xf32>
    %30 = arith.addf %28, %29 : vector<16x1xf32>
    %31 = math.rsqrt %30 : vector<16x1xf32>
    %32 = vector.broadcast %31 : vector<16x1xf32> to vector<16x32xf32>
    %33 = arith.mulf %23, %32 : vector<16x32xf32>
    %34 = vector.broadcast %15 : vector<1x32xf32> to vector<16x32xf32>
    %35 = arith.mulf %33, %34 : vector<16x32xf32>
    %36 = vector.broadcast %16 : vector<1x32xf32> to vector<16x32xf32>
    %37 = arith.addf %35, %36 : vector<16x32xf32>
    %c0_21 = arith.constant 0 : index
    %c0_22 = arith.constant 0 : index
    %38 = vector.load %arg8[%c0_21, %c0_22] : memref<16x32xf32, #tpu.memory_space<vmem>>, vector<16x32xf32>
    tpu.vector_store %arg8[%c0_21, %c0_22], %37 {strides = array<i32>} : memref<16x32xf32, #tpu.memory_space<vmem>>, vector<16x32xf32>,
    return
  }
  func.func @transform_0(%arg0: i32) -> (i32, i32) {
    %c0_i32 = arith.constant 0 : i32
    %c0_i32_0 = arith.constant 0 : i32
    return %arg0, %c0_i32 : i32, i32
  }
  func.func @transform_1(%arg0: i32) -> (i32, i32) {
    %c0_i32 = arith.constant 0 : i32
    %c0_i32_0 = arith.constant 0 : i32
    %c0_i32_1 = arith.constant 0 : i32
    return %c0_i32, %c0_i32_0 : i32, i32
  }
  func.func @transform_2(%arg0: i32) -> (i32, i32) {
    %c0_i32 = arith.constant 0 : i32
    %c0_i32_0 = arith.constant 0 : i32
    %c0_i32_1 = arith.constant 0 : i32
    return %c0_i32, %c0_i32_0 : i32, i32
  }
  func.func @transform_3(%arg0: i32) -> (i32, i32) {
    %c0_i32 = arith.constant 0 : i32
    %c0_i32_0 = arith.constant 0 : i32
    %c0_i32_1 = arith.constant 0 : i32
    return %c0_i32, %c0_i32_0 : i32, i32
  }
  func.func @transform_4(%arg0: i32) -> (i32, i32) {
    %c0_i32 = arith.constant 0 : i32
    %c0_i32_0 = arith.constant 0 : i32
    %c0_i32_1 = arith.constant 0 : i32
    return %c0_i32, %c0_i32_0 : i32, i32
  }
  func.func @transform_5(%arg0: i32) -> (i32, i32) {
    %c0_i32 = arith.constant 0 : i32
    %c0_i32_0 = arith.constant 0 : i32
    %c0_i32_1 = arith.constant 0 : i32
    return %c0_i32, %c0_i32_0 : i32, i32
  }
  func.func @transform_6(%arg0: i32) -> (i32, i32) {
    %c0_i32 = arith.constant 0 : i32
    %c0_i32_0 = arith.constant 0 : i32
    %c0_i32_1 = arith.constant 0 : i32
    return %c0_i32, %c0_i32_0 : i32, i32
  }
  func.func @transform_7(%arg0: i32) -> (i32, i32) {
    %c0_i32 = arith.constant 0 : i32
    %c0_i32_0 = arith.constant 0 : i32
    return %arg0, %c0_i32 : i32, i32
  }
}

</mosaic_0001>

<llo_original>
// kernel: feed_forward_layer.1
$region0: #{feed_forward_layer.1}
  #allocation0 [shape = 'u32[]', space=smem, size = 0x4, offset = 0x4, fixed_abs, tag = 'smem constant byte address 0x4 - core index']
  #allocation1 [shape = 'u32[144,128]{1,0:T(1,128)}', space=vmem, size = 0x12000, scoped, tag = 'internal scratch']
  %s0 = inlined_call_operand.vmem [shape: f32[16,32], index: 0, kind: input, shape index: {}]
  %s1 = inlined_call_operand.vmem [shape: f32[32,64], index: 1, kind: input, shape index: {}]
  %s2 = inlined_call_operand.vmem [shape: f32[1,64], index: 2, kind: input, shape index: {}]
  %s3 = inlined_call_operand.vmem [shape: f32[64,32], index: 3, kind: input, shape index: {}]
  %s4 = inlined_call_operand.vmem [shape: f32[1,32], index: 4, kind: input, shape index: {}]
  %s5 = inlined_call_operand.vmem [shape: f32[1,32], index: 5, kind: input, shape index: {}]
  %s6 = inlined_call_operand.vmem [shape: f32[1,32], index: 6, kind: input, shape index: {}]
  %s7 = inlined_call_operand.hbm [shape: f32[16,32], index: 7, kind: output, shape index: {}]
  %s8 = sld [smem:[#allocation0]]
  $region38: #{feed_forward_layer.1} parent=0
    _
  %s10 = ssub.s32 1, %s8
  %s11 = scalar_select 0, %s10, %s8
  $region1: #{feed_forward_layer.1} parent=0
    #allocation2 [shape = 'u8[8192]{0}', space=vmem, size = 0x2000, scoped, tag = 'output window, operand 0, single buffered']
    #allocation3 [shape = 's32[1]{0}', space=sflag, size = 0x4, scoped, tag = 'scoped memory for feed_forward_layer.1']
    %12 = vsyncpa [#allocation3], 0
    // Predicated region
    $region2: #{feed_forward_layer.1} parent=1 // pred_check
      _
    $region3: #{feed_forward_layer.1} parent=1 // pred_check_branch
      %14 = sbr.rel (0) target = $region5
    $region4: #{feed_forward_layer.1} parent=1 // pred_region
      _
    $region5: #{feed_forward_layer.1} parent=1 // pred_fallthru
      _
    // Predicated region
    $region6: #{feed_forward_layer.1} parent=1 // pred_check
      _
    $region7: #{feed_forward_layer.1} parent=1 // pred_check_branch
      %16 = sbr.rel (0) target = $region9
    $region8: #{feed_forward_layer.1} parent=1 // pred_region
      _
    $region9: #{feed_forward_layer.1} parent=1 // pred_fallthru
      _
    // Predicated region
    $region10: #{feed_forward_layer.1} parent=1 // pred_check
      _
    $region11: #{feed_forward_layer.1} parent=1 // pred_check_branch
      %18 = sbr.rel (0) target = $region13
    $region12: #{feed_forward_layer.1} parent=1 // pred_region
      _
    $region13: #{feed_forward_layer.1} parent=1 // pred_fallthru
      _
    // Predicated region
    $region14: #{feed_forward_layer.1} parent=1 // pred_check
      _
    $region15: #{feed_forward_layer.1} parent=1 // pred_check_branch
      %20 = sbr.rel (0) target = $region17
    $region16: #{feed_forward_layer.1} parent=1 // pred_region
      _
    $region17: #{feed_forward_layer.1} parent=1 // pred_fallthru
      _
    // Predicated region
    $region18: #{feed_forward_layer.1} parent=1 // pred_check
      _
    $region19: #{feed_forward_layer.1} parent=1 // pred_check_branch
      %22 = sbr.rel (0) target = $region21
    $region20: #{feed_forward_layer.1} parent=1 // pred_region
      _
    $region21: #{feed_forward_layer.1} parent=1 // pred_fallthru
      _
    // Predicated region
    $region22: #{feed_forward_layer.1} parent=1 // pred_check
      _
    $region23: #{feed_forward_layer.1} parent=1 // pred_check_branch
      %24 = sbr.rel (0) target = $region25
    $region24: #{feed_forward_layer.1} parent=1 // pred_region
      _
    $region25: #{feed_forward_layer.1} parent=1 // pred_fallthru
      _
    // Predicated region
    $region26: #{feed_forward_layer.1} parent=1 // pred_check
      _
    $region27: #{feed_forward_layer.1} parent=1 // pred_check_branch
      %26 = sbr.rel (0) target = $region29
    $region28: #{feed_forward_layer.1} parent=1 // pred_region
      _
    $region29: #{feed_forward_layer.1} parent=1 // pred_fallthru
      _
    %v27 = vld [vmem:[%s0] sm:$0xff]
    %v28 = vld [vmem:[%s0 + $0x8] sm:$0xff]
    %v29 = vld [vmem:[%s1] sm:$0xff]
    %v30 = vld [vmem:[%s1 + $0x8] sm:$0xff]
    %v31 = vld [vmem:[%s1 + $0x10] sm:$0xff]
    %v32 = vld [vmem:[%s1 + $0x18] sm:$0xff]
    %v33 = vld [vmem:[%s2] sm:$0x1]
    %v35 = vlaneseq
    %v36 = vshrl.u32 %v35, 7
    %v37 = vsub.s32 0, %v36
    %v38 = vrot.slane %v33, %v37
    %vm40 = vcmask 261120
    %v42 = vsel %vm40, %v27, 0
    %v45 = vsel %vm40, %v28, 0
    %47 = vmatprep.subr.mxu0 0.0
    %48 = vmatpush1.msra.mxu0 0.0
    %49 = vmatprep.subr.mxu0 0.0
    %50 = vmatpush1.msra.mxu0 0.0
    %51 = vmatprep.subr.mxu0 0.0
    %52 = vmatpush1.msra.mxu0 0.0
    %53 = vmatprep.subr.mxu0 0.0
    %54 = vmatpush1.msra.mxu0 0.0
    %55 = vmatprep.subr.mxu0 0.0
    %56 = vmatpush1.msra.mxu0 0.0
    %57 = vmatprep.subr.mxu0 0.0
    %58 = vmatpush1.msra.mxu0 0.0
    %59 = vmatprep.subr.mxu0 0.0
    %60 = vmatpush1.msra.mxu0 0.0
    %61 = vmatprep.subr.mxu0 0.0
    %62 = vmatpush1.msra.mxu0 0.0
    %63 = vmatprep.subr.mxu0 0.0
    %64 = vmatpush1.msra.mxu0 0.0
    %65 = vmatprep.subr.mxu0 0.0
    %66 = vmatpush1.msra.mxu0 0.0
    %67 = vmatprep.subr.mxu0 0.0
    %68 = vmatpush1.msra.mxu0 0.0
    %69 = vmatprep.subr.mxu0 0.0
    %70 = vmatpush1.msra.mxu0 0.0
    %71 = vmatprep.subr.mxu0 0.0
    %72 = vmatpush1.msra.mxu0 %v32
    %73 = vmatprep.subr.mxu0 0.0
    %74 = vmatpush1.msra.mxu0 %v31
    %75 = vmatprep.subr.mxu0 0.0
    %76 = vmatpush1.msra.mxu0 %v30
    %77 = vmatprep.subr.mxu0 0.0
    %78 = vmatpush1.msra.mxu0 %v29
    %79 = vmatprep.subr.mxu0 0.0
    %80 = vmatpush2.msra.mxu0 0.0
    %81 = vmatprep.subr.mxu0 0.0
    %82 = vmatpush2.msra.mxu0 0.0
    %83 = vmatprep.subr.mxu0 0.0
    %84 = vmatpush2.msra.mxu0 0.0
    %85 = vmatprep.subr.mxu0 0.0
    %86 = vmatpush2.msra.mxu0 0.0
    %87 = vmatprep.subr.mxu0 0.0
    %88 = vmatpush2.msra.mxu0 0.0
    %89 = vmatprep.subr.mxu0 0.0
    %90 = vmatpush2.msra.mxu0 0.0
    %91 = vmatprep.subr.mxu0 0.0
    %92 = vmatpush2.msra.mxu0 0.0
    %93 = vmatprep.subr.mxu0 0.0
    %94 = vmatpush2.msra.mxu0 0.0
    %95 = vmatprep.subr.mxu0 0.0
    %96 = vmatpush2.msra.mxu0 0.0
    %97 = vmatprep.subr.mxu0 0.0
    %98 = vmatpush2.msra.mxu0 0.0
    %99 = vmatprep.subr.mxu0 0.0
    %100 = vmatpush2.msra.mxu0 0.0
    %101 = vmatprep.subr.mxu0 0.0
    %102 = vmatpush2.msra.mxu0 0.0
    %103 = vmatprep.subr.mxu0 0.0
    %104 = vmatpush2.msra.mxu0 0.0
    %105 = vmatprep.subr.mxu0 0.0
    %106 = vmatpush2.msra.mxu0 0.0
    %107 = vmatprep.subr.mxu0 0.0
    %108 = vmatpush2.msra.mxu0 0.0
    %109 = vmatprep.subr.mxu0 0.0
    %110 = vmatpush2.msra.mxu0 0.0
    %111 = vmatprep.mubr.f32.mxu0 0.0
    %112 = vmatmul.mubr.f32.gmra.mxu0 %v42
    %v113 = vpop.f32.mrf.mxu0
    %v114 = vadd.f32 %v38, %v113
    %v115 = vpop.f32.mrf.mxu0
    %116 = vmatprep.mubr.f32.mxu0 0.0
    %117 = vmatmul.mubr.f32.gmra.mxu0 %v45
    %v118 = vpop.f32.mrf.mxu0
    %v119 = vadd.f32 %v38, %v118
    %v120 = vpop.f32.mrf.mxu0
    %121 = vdwg.mxu0
    %v122 = vmax.f32 %v114, 0.0
    %v123 = vmax.f32 %v119, 0.0
    %v124 = vld [vmem:[%s3] sm:$0xff]
    %v125 = vld [vmem:[%s3 + $0x8] sm:$0xff]
    %v126 = vld [vmem:[%s3 + $0x10] sm:$0xff]
    %v127 = vld [vmem:[%s3 + $0x18] sm:$0xff]
    %v128 = vld [vmem:[%s3 + $0x20] sm:$0xff]
    %v129 = vld [vmem:[%s3 + $0x28] sm:$0xff]
    %v130 = vld [vmem:[%s3 + $0x30] sm:$0xff]
    %v131 = vld [vmem:[%s3 + $0x38] sm:$0xff]
    %v132 = vld [vmem:[%s4] sm:$0x1]
    %v134 = vlaneseq
    %v135 = vshrl.u32 %v134, 7
    %v136 = vsub.s32 0, %v135
    %v137 = vrot.slane %v132, %v136
    %vm139 = vcmask 523264
    %v141 = vsel %vm139, %v122, 0
    %v144 = vsel %vm139, %v123, 0
    %146 = vmatprep.subr.mxu0 0.0
    %147 = vmatpush1.msra.mxu0 0.0
    %148 = vmatprep.subr.mxu0 0.0
    %149 = vmatpush1.msra.mxu0 0.0
    %150 = vmatprep.subr.mxu0 0.0
    %151 = vmatpush1.msra.mxu0 0.0
    %152 = vmatprep.subr.mxu0 0.0
    %153 = vmatpush1.msra.mxu0 0.0
    %154 = vmatprep.subr.mxu0 0.0
    %155 = vmatpush1.msra.mxu0 0.0
    %156 = vmatprep.subr.mxu0 0.0
    %157 = vmatpush1.msra.mxu0 0.0
    %158 = vmatprep.subr.mxu0 0.0
    %159 = vmatpush1.msra.mxu0 0.0
    %160 = vmatprep.subr.mxu0 0.0
    %161 = vmatpush1.msra.mxu0 0.0
    %162 = vmatprep.subr.mxu0 0.0
    %163 = vmatpush1.msra.mxu0 %v131
    %164 = vmatprep.subr.mxu0 0.0
    %165 = vmatpush1.msra.mxu0 %v130
    %166 = vmatprep.subr.mxu0 0.0
    %167 = vmatpush1.msra.mxu0 %v129
    %168 = vmatprep.subr.mxu0 0.0
    %169 = vmatpush1.msra.mxu0 %v128
    %170 = vmatprep.subr.mxu0 0.0
    %171 = vmatpush1.msra.mxu0 %v127
    %172 = vmatprep.subr.mxu0 0.0
    %173 = vmatpush1.msra.mxu0 %v126
    %174 = vmatprep.subr.mxu0 0.0
    %175 = vmatpush1.msra.mxu0 %v125
    %176 = vmatprep.subr.mxu0 0.0
    %177 = vmatpush1.msra.mxu0 %v124
    %178 = vmatprep.subr.mxu0 0.0
    %179 = vmatpush2.msra.mxu0 0.0
    %180 = vmatprep.subr.mxu0 0.0
    %181 = vmatpush2.msra.mxu0 0.0
    %182 = vmatprep.subr.mxu0 0.0
    %183 = vmatpush2.msra.mxu0 0.0
    %184 = vmatprep.subr.mxu0 0.0
    %185 = vmatpush2.msra.mxu0 0.0
    %186 = vmatprep.subr.mxu0 0.0
    %187 = vmatpush2.msra.mxu0 0.0
    %188 = vmatprep.subr.mxu0 0.0
    %189 = vmatpush2.msra.mxu0 0.0
    %190 = vmatprep.subr.mxu0 0.0
    %191 = vmatpush2.msra.mxu0 0.0
    %192 = vmatprep.subr.mxu0 0.0
    %193 = vmatpush2.msra.mxu0 0.0
    %194 = vmatprep.subr.mxu0 0.0
    %195 = vmatpush2.msra.mxu0 0.0
    %196 = vmatprep.subr.mxu0 0.0
    %197 = vmatpush2.msra.mxu0 0.0
    %198 = vmatprep.subr.mxu0 0.0
    %199 = vmatpush2.msra.mxu0 0.0
    %200 = vmatprep.subr.mxu0 0.0
    %201 = vmatpush2.msra.mxu0 0.0
    %202 = vmatprep.subr.mxu0 0.0
    %203 = vmatpush2.msra.mxu0 0.0
    %204 = vmatprep.subr.mxu0 0.0
    %205 = vmatpush2.msra.mxu0 0.0
    %206 = vmatprep.subr.mxu0 0.0
    %207 = vmatpush2.msra.mxu0 0.0
    %208 = vmatprep.subr.mxu0 0.0
    %209 = vmatpush2.msra.mxu0 0.0
    %210 = vmatprep.mubr.f32.mxu0 0.0
    %211 = vmatmul.mubr.f32.gmra.mxu0 %v141
    %v212 = vpop.f32.mrf.mxu0
    %v213 = vadd.f32 %v137, %v212
    %v214 = vpop.f32.mrf.mxu0
    %215 = vmatprep.mubr.f32.mxu0 0.0
    %216 = vmatmul.mubr.f32.gmra.mxu0 %v144
    %v217 = vpop.f32.mrf.mxu0
    %v218 = vadd.f32 %v137, %v217
    %v219 = vpop.f32.mrf.mxu0
    %220 = vdwg.mxu0
    %v221 = vmax.f32 %v213, 0.0
    %v222 = vmax.f32 %v218, 0.0
    %v223 = vld [vmem:[%s5] sm:$0x1]
    %v224 = vld [vmem:[%s6] sm:$0x1]
    %v225 = vadd.f32 %v27, %v221
    %v226 = vadd.f32 %v28, %v222
    %v227 = vsel %vm40, %v225, 0.0
    %228 = vadd.xlane.f32.xlu0 %v227
    %v229 = vpop.xlane.xlu0 %228
    %v230 = vsel %vm40, %v226, 0.0
    %231 = vadd.xlane.f32.xlu0 %v230
    %v232 = vpop.xlane.xlu0 %231
    %v233 = vmul.f32 %v229, 0.03125
    %v234 = vmul.f32 %v232, 0.03125
    %v235 = vsub.f32 %v225, %v233
    %v236 = vsub.f32 %v226, %v234
    %v237 = vmul.f32 %v235, %v235
    %v238 = vmul.f32 %v236, %v236
    %v239 = vsel %vm40, %v237, 0.0
    %240 = vadd.xlane.f32.xlu0 %v239
    %v241 = vpop.xlane.xlu0 %240
    %v242 = vsel %vm40, %v238, 0.0
    %243 = vadd.xlane.f32.xlu0 %v242
    %v244 = vpop.xlane.xlu0 %243
    %v245 = vmul.f32 %v241, 0.03125
    %v246 = vmul.f32 %v244, 0.03125
    %v247 = vadd.f32 %v245, 1e-05
    %v248 = vadd.f32 %v246, 1e-05
    %v249 = vrsqrt.pop %v247
    %v250 = vrsqrt.pop %v248
    %v251 = vmul.f32 %v235, %v249
    %v252 = vmul.f32 %v236, %v250
    %v254 = vlaneseq
    %v255 = vshrl.u32 %v254, 7
    %v256 = vsub.s32 0, %v255
    %v257 = vrot.slane %v223, %v256
    %v259 = vmul.f32 %v251, %v257
    %v260 = vmul.f32 %v252, %v257
    %v262 = vlaneseq
    %v263 = vshrl.u32 %v262, 7
    %v264 = vsub.s32 0, %v263
    %v265 = vrot.slane %v224, %v264
    %v267 = vadd.f32 %v259, %v265
    %v268 = vadd.f32 %v260, %v265
    %269 = vst.msk [vmem:[#allocation2] sm:$0xff] %vm40, %v267
    %270 = vst.msk [vmem:[#allocation2 + $0x8] sm:$0xff] %vm40, %v268
    // Predicated region
    $region30: #{feed_forward_layer.1} parent=1 // pred_check
      _
    $region31: #{feed_forward_layer.1} parent=1 // pred_check_branch
      %272 = sbr.rel (0) target = $region33
    $region32: #{feed_forward_layer.1} parent=1 // pred_region
      %s274 = ssub.s32 256, 256
      %275 = vsyncadd [#allocation3], %s274
      %s276 = sshll.u32 [#allocation2], 4
      %s277 = int_to_ptr.vmem [resolvable:$true] %s276
      %282 = dma.vmem_to_hbm [thread:$0]  %s277, 256, %s7, [#allocation3], 128, 128, 8
    $region33: #{feed_forward_layer.1} parent=1 // pred_fallthru
      _
    // Predicated region
    $region34: #{feed_forward_layer.1} parent=1 // pred_check
      _
    $region35: #{feed_forward_layer.1} parent=1 // pred_check_branch
      %284 = sbr.rel (0) target = $region37
    $region36: #{feed_forward_layer.1} parent=1 // pred_region
      %285 = dma.done [#allocation3], 256
    $region37: #{feed_forward_layer.1} parent=1 // pred_fallthru
      _
    %286 = vsyncpa [#allocation3], 1

</llo_original>
